<compile_context>
chip_gen: v7x
topology: tpu7x:2x2x1
jax: 0.10.0
libtpu: 0.0.40
codegen_flags: <defaults>
</compile_context>

<pallas_src>
import jax
import jax.numpy as jnp
from jax.experimental import pallas as pl
from jax.experimental.pallas import tpu as pltpu


def shared_value_add_kernel(
    sa_ref,                 # [S+A, TB]   fused [s|a] activations, batch on lanes
    we_ref, be_ref,         # [E, S+A], [E, 1]   fused (state|action) embedding
    w1_ref, b1_ref,         # [H, E],  [H, 1]    affines[0]
    w2_ref, b2_ref,         # [H, 1],  [1, 1]    affines[1] (hidden -> 1)
    o_ref,                  # [1, TB]            lane-dense output tile
):
    # Fused embedding layer: one MXU dot replaces state_embed + action_embed + add.
    x = jnp.dot(we_ref[...], sa_ref[...].astype(we_ref.dtype),
                preferred_element_type=jnp.float32) + be_ref[...]        # [E, TB] f32
    # x = affines[0](relu(x))
    x = jnp.maximum(x, 0.0)
    x = jnp.dot(w1_ref[...], x.astype(w1_ref.dtype),
                preferred_element_type=jnp.float32) + b1_ref[...]        # [H, TB] f32
    # x = affines[1](relu(x)) -- hidden -> 1 done as VPU multiply + sublane reduce
    # instead of a 1-wide MXU matmul.
    x = jnp.maximum(x, 0.0)
    y = jnp.sum(x * w2_ref[...], axis=0, keepdims=True) + b2_ref[...]    # [1, TB] f32
    o_ref[...] = y.astype(o_ref.dtype)


def shared_value_add(s, a, params, *, partial_idx=None, block_b=512,
                     compute_dtype=jnp.float32):
    """s: [B, state_dim], a: [B, action_dim(_full)] -> [B, 1] (float32)."""
    (ws, bs, wa, ba, w1, b1, w2, b2) = params     # PyTorch layout: W [out, in], b [out]

    if partial_idx is not None:
        # `partial=True` column gather is pure glue; done wrapper-side.
        a = a[:, partial_idx]

    B = s.shape[0]
    E = ws.shape[0]
    H = w1.shape[0]

    # --- Fuse the two embeddings (wrapper-side weight prep, done once under jit) ---
    we = jnp.concatenate([ws, wa], axis=1).astype(compute_dtype)   # [E, S+A]
    be = (bs + ba).astype(jnp.float32).reshape(E, 1)               # [E, 1]
    w1k = w1.astype(compute_dtype)                                 # [H, E]
    b1k = b1.astype(jnp.float32).reshape(H, 1)                     # [H, 1]
    w2k = w2.astype(jnp.float32).reshape(H, 1)                     # [H, 1] (VPU path, keep f32)
    b2k = b2.astype(jnp.float32).reshape(1, 1)                     # [1, 1]

    # Batch on the lane axis: activations are [feature, batch].
    sa = jnp.concatenate([s, a], axis=1).T.astype(compute_dtype)   # [S+A, B]
    F = sa.shape[0]

    # Batch tile: whole batch if it fits one tile, else a 128-multiple so every
    # tiled block stays lane-aligned.
    if B <= block_b:
        tb = B
    else:
        assert block_b % 128 == 0, "block_b must be a multiple of 128 for lane alignment"
        tb = block_b
    grid = (pl.cdiv(B, tb),)

    in_specs = [
        pl.BlockSpec((F, tb), lambda i: (0, i)),   # sa: tiled over batch (lanes)
        pl.BlockSpec((E, F), lambda i: (0, 0)),    # we: grid-invariant, VMEM-resident
        pl.BlockSpec((E, 1), lambda i: (0, 0)),    # be
        pl.BlockSpec((H, E), lambda i: (0, 0)),    # w1
        pl.BlockSpec((H, 1), lambda i: (0, 0)),    # b1
        pl.BlockSpec((H, 1), lambda i: (0, 0)),    # w2
        pl.BlockSpec((1, 1), lambda i: (0, 0)),    # b2
    ]
    out_spec = pl.BlockSpec((1, tb), lambda i: (0, i))

    out = pl.pallas_call(
        shared_value_add_kernel,
        out_shape=jax.ShapeDtypeStruct((1, B), jnp.float32),
        grid=grid,
        in_specs=in_specs,
        out_specs=out_spec,
        compiler_params=pltpu.CompilerParams(
            dimension_semantics=("parallel",)),
    )(sa, we, be, w1k, b1k, w2k, b2k)

    return out.T                                   # [B, 1], matching the module


def init_params(key, state_dim, action_dim, embed_dim, hidden_dim):
    """Deterministic synthetic parameters in PyTorch nn.Linear layout (W [out,in], b [out])."""
    ks = jax.random.split(key, 8)

    def lin(kw, kb, fan_in, fan_out):
        bound = 1.0 / jnp.sqrt(jnp.float32(fan_in))
        w = jax.random.uniform(kw, (fan_out, fan_in), jnp.float32, -bound, bound)
        b = jax.random.uniform(kb, (fan_out,), jnp.float32, -bound, bound)
        return w, b

    ws, bs = lin(ks[0], ks[1], state_dim, embed_dim)    # state_embed
    wa, ba = lin(ks[2], ks[3], action_dim, embed_dim)   # action_embed
    w1, b1 = lin(ks[4], ks[5], embed_dim, hidden_dim)   # affines[0]
    w2, b2 = lin(ks[6], ks[7], hidden_dim, 1)           # affines[1]
    return (ws, bs, wa, ba, w1, b1, w2, b2)


def reference_forward(s, a, params):
    """Pure-JAX f32 reference matching the PyTorch module semantics."""
    (ws, bs, wa, ba, w1, b1, w2, b2) = params
    x = (s @ ws.T + bs) + (a @ wa.T + ba)
    x = jnp.maximum(x, 0.0) @ w1.T + b1
    x = jnp.maximum(x, 0.0) @ w2.T + b2
    return x


if __name__ == "__main__":
    B, state_dim, action_dim, embed_dim, hidden_dim = 8, 16, 8, 32, 64

    key = jax.random.PRNGKey(0)
    k_s, k_a, k_p, k_af = jax.random.split(key, 4)
    s = jax.random.normal(k_s, (B, state_dim), jnp.float32)
    a = jax.random.normal(k_a, (B, action_dim), jnp.float32)
    params = init_params(k_p, state_dim, action_dim, embed_dim, hidden_dim)

    # f32 path (exact module semantics).
    out = shared_value_add(s, a, params)
    out = jax.block_until_ready(out)
    ref = reference_forward(s, a, params)
    assert out.shape == (B, 1), out.shape
    assert jnp.allclose(out, ref, atol=1e-4, rtol=1e-4), (out, ref)

    # bf16-dot path (f32 accumulate / f32 elementwise), looser tolerance.
    out_bf16 = shared_value_add(s, a, params, compute_dtype=jnp.bfloat16)
    out_bf16 = jax.block_until_ready(out_bf16)
    assert jnp.allclose(out_bf16, ref, atol=5e-2, rtol=5e-2), (out_bf16, ref)

    # partial=True path: gather action columns wrapper-side, then same kernel.
    a_full = jax.random.normal(k_af, (B, 12), jnp.float32)
    partial_idx = jnp.array([0, 2, 3, 5, 7, 8, 10, 11], dtype=jnp.int32)
    out_p = shared_value_add(s, a_full, params, partial_idx=partial_idx)
    out_p = jax.block_until_ready(out_p)
    ref_p = reference_forward(s, a_full[:, partial_idx], params)
    assert jnp.allclose(out_p, ref_p, atol=1e-4, rtol=1e-4), (out_p, ref_p)

    print("KERNEL_OK")
</pallas_src>

<mosaic_0001>
module attributes {stable_mosaic.version = 11 : i64} {
  func.func @shared_value_add_kernel(%arg0: i32, %arg1: memref<24x8xf32, #tpu.memory_space<vmem>>, %arg2: memref<32x24xf32, #tpu.memory_space<vmem>>, %arg3: memref<32x1xf32, #tpu.memory_space<vmem>>, %arg4: memref<64x32xf32, #tpu.memory_space<vmem>>, %arg5: memref<64x1xf32, #tpu.memory_space<vmem>>, %arg6: memref<64x1xf32, #tpu.memory_space<vmem>>, %arg7: memref<1x1xf32, #tpu.memory_space<vmem>>, %arg8: memref<1x8xf32, #tpu.memory_space<vmem>>) attributes {dimension_semantics = [#tpu.dimension_semantics<parallel>], iteration_bounds = array<i64: 1>, scalar_prefetch = 0 : i64, scratch_operands = 0 : i64, tpu.core_type = #tpu.core_type<tc>, window_params = [{transform_indices = @transform_0, window_bounds = array<i64: 24, 8>}, {pipeline_mode = #tpu.pipeline_mode<synchronous>, transform_indices = @transform_1, window_bounds = array<i64: 32, 24>}, {pipeline_mode = #tpu.pipeline_mode<synchronous>, transform_indices = @transform_2, window_bounds = array<i64: 32, 1>}, {pipeline_mode = #tpu.pipeline_mode<synchronous>, transform_indices = @transform_3, window_bounds = array<i64: 64, 32>}, {pipeline_mode = #tpu.pipeline_mode<synchronous>, transform_indices = @transform_4, window_bounds = array<i64: 64, 1>}, {pipeline_mode = #tpu.pipeline_mode<synchronous>, transform_indices = @transform_5, window_bounds = array<i64: 64, 1>}, {pipeline_mode = #tpu.pipeline_mode<synchronous>, transform_indices = @transform_6, window_bounds = array<i64: 1, 1>}, {transform_indices = @transform_7, window_bounds = array<i64: 1, 8>}]} {
    %c0 = arith.constant 0 : index
    %c0_0 = arith.constant 0 : index
    %0 = vector.load %arg2[%c0, %c0_0] : memref<32x24xf32, #tpu.memory_space<vmem>>, vector<32x24xf32>
    %c0_1 = arith.constant 0 : index
    %c0_2 = arith.constant 0 : index
    %1 = vector.load %arg1[%c0_1, %c0_2] : memref<24x8xf32, #tpu.memory_space<vmem>>, vector<24x8xf32>
    %cst = arith.constant dense<0.000000e+00> : vector<32x8xf32>
    %2 = tpu.matmul %0, %1, %cst {dimension_numbers = #tpu.dot_dimension_numbers<[1], [0], [0], [1], [0, 0, 1, 1], [], []>} : vector<32x24xf32>, vector<24x8xf32>, vector<32x8xf32> -> vector<32x8xf32>
    %c0_3 = arith.constant 0 : index
    %c0_4 = arith.constant 0 : index
    %3 = vector.load %arg3[%c0_3, %c0_4] : memref<32x1xf32, #tpu.memory_space<vmem>>, vector<32x1xf32>
    %4 = vector.broadcast %3 : vector<32x1xf32> to vector<32x8xf32>
    %5 = arith.addf %2, %4 : vector<32x8xf32>
    %cst_5 = arith.constant 0.000000e+00 : f32
    %6 = vector.broadcast %cst_5 : f32 to vector<32x8xf32>
    %7 = arith.maximumf %5, %6 : vector<32x8xf32>
    %c0_6 = arith.constant 0 : index
    %c0_7 = arith.constant 0 : index
    %8 = vector.load %arg4[%c0_6, %c0_7] : memref<64x32xf32, #tpu.memory_space<vmem>>, vector<64x32xf32>
    %cst_8 = arith.constant dense<0.000000e+00> : vector<64x8xf32>
    %9 = tpu.matmul %8, %7, %cst_8 {dimension_numbers = #tpu.dot_dimension_numbers<[1], [0], [0], [1], [0, 0, 1, 1], [], []>} : vector<64x32xf32>, vector<32x8xf32>, vector<64x8xf32> -> vector<64x8xf32>
    %c0_9 = arith.constant 0 : index
    %c0_10 = arith.constant 0 : index
    %10 = vector.load %arg5[%c0_9, %c0_10] : memref<64x1xf32, #tpu.memory_space<vmem>>, vector<64x1xf32>
    %11 = vector.broadcast %10 : vector<64x1xf32> to vector<64x8xf32>
    %12 = arith.addf %9, %11 : vector<64x8xf32>
    %cst_11 = arith.constant 0.000000e+00 : f32
    %13 = vector.broadcast %cst_11 : f32 to vector<64x8xf32>
    %14 = arith.maximumf %12, %13 : vector<64x8xf32>
    %c0_12 = arith.constant 0 : index
    %c0_13 = arith.constant 0 : index
    %15 = vector.load %arg6[%c0_12, %c0_13] : memref<64x1xf32, #tpu.memory_space<vmem>>, vector<64x1xf32>
    %16 = vector.broadcast %15 : vector<64x1xf32> to vector<64x8xf32>
    %17 = arith.mulf %14, %16 : vector<64x8xf32>
    %cst_14 = arith.constant dense<0.000000e+00> : vector<8xf32>
    %18 = vector.multi_reduction <add>, %17, %cst_14 [0] : vector<64x8xf32> to vector<8xf32>
    %19 = vector.shape_cast %18 : vector<8xf32> to vector<1x8xf32>
    %c0_15 = arith.constant 0 : index
    %c0_16 = arith.constant 0 : index
    %20 = vector.load %arg7[%c0_15, %c0_16] : memref<1x1xf32, #tpu.memory_space<vmem>>, vector<1x1xf32>
    %21 = vector.broadcast %20 : vector<1x1xf32> to vector<1x8xf32>
    %22 = arith.addf %19, %21 : vector<1x8xf32>
    %c0_17 = arith.constant 0 : index
    %c0_18 = arith.constant 0 : index
    %23 = vector.load %arg8[%c0_17, %c0_18] : memref<1x8xf32, #tpu.memory_space<vmem>>, vector<1x8xf32>
    tpu.vector_store %arg8[%c0_17, %c0_18], %22 {strides = array<i32>} : memref<1x8xf32, #tpu.memory_space<vmem>>, vector<1x8xf32>,
    return
  }
  func.func @transform_0(%arg0: i32) -> (i32, i32) {
    %c0_i32 = arith.constant 0 : i32
    %c0_i32_0 = arith.constant 0 : i32
    return %c0_i32, %arg0 : i32, i32
  }
  func.func @transform_1(%arg0: i32) -> (i32, i32) {
    %c0_i32 = arith.constant 0 : i32
    %c0_i32_0 = arith.constant 0 : i32
    %c0_i32_1 = arith.constant 0 : i32
    return %c0_i32, %c0_i32_0 : i32, i32
  }
  func.func @transform_2(%arg0: i32) -> (i32, i32) {
    %c0_i32 = arith.constant 0 : i32
    %c0_i32_0 = arith.constant 0 : i32
    %c0_i32_1 = arith.constant 0 : i32
    return %c0_i32, %c0_i32_0 : i32, i32
  }
  func.func @transform_3(%arg0: i32) -> (i32, i32) {
    %c0_i32 = arith.constant 0 : i32
    %c0_i32_0 = arith.constant 0 : i32
    %c0_i32_1 = arith.constant 0 : i32
    return %c0_i32, %c0_i32_0 : i32, i32
  }
  func.func @transform_4(%arg0: i32) -> (i32, i32) {
    %c0_i32 = arith.constant 0 : i32
    %c0_i32_0 = arith.constant 0 : i32
    %c0_i32_1 = arith.constant 0 : i32
    return %c0_i32, %c0_i32_0 : i32, i32
  }
  func.func @transform_5(%arg0: i32) -> (i32, i32) {
    %c0_i32 = arith.constant 0 : i32
    %c0_i32_0 = arith.constant 0 : i32
    %c0_i32_1 = arith.constant 0 : i32
    return %c0_i32, %c0_i32_0 : i32, i32
  }
  func.func @transform_6(%arg0: i32) -> (i32, i32) {
    %c0_i32 = arith.constant 0 : i32
    %c0_i32_0 = arith.constant 0 : i32
    %c0_i32_1 = arith.constant 0 : i32
    return %c0_i32, %c0_i32_0 : i32, i32
  }
  func.func @transform_7(%arg0: i32) -> (i32, i32) {
    %c0_i32 = arith.constant 0 : i32
    %c0_i32_0 = arith.constant 0 : i32
    return %c0_i32, %arg0 : i32, i32
  }
}

</mosaic_0001>

<llo_original>
// kernel: tpu_custom_call.1
$region0: #{tpu_custom_call.1}
  #allocation0 [shape = 'u32[]', space=smem, size = 0x4, offset = 0x4, fixed_abs, tag = 'smem constant byte address 0x4 - core index']
  #allocation1 [shape = 'u32[144,128]{1,0:T(1,128)}', space=vmem, size = 0x12000, scoped, tag = 'internal scratch']
  #allocation2 [shape = 'f32[1,1]{1,0:T(1,128)S(1)}', space=vmem, size = 0x200, scoped, tag = 'scoped memory for tpu_custom_call.1']
  %s0 = inlined_call_operand.vmem [shape: f32[24,8], index: 0, kind: input, shape index: {}]
  %s1 = inlined_call_operand.vmem [shape: f32[32,24], index: 1, kind: input, shape index: {}]
  %s2 = inlined_call_operand.vmem [shape: f32[32,1], index: 2, kind: input, shape index: {}]
  %s3 = inlined_call_operand.vmem [shape: f32[64,32], index: 3, kind: input, shape index: {}]
  %s4 = inlined_call_operand.vmem [shape: f32[64,1], index: 4, kind: input, shape index: {}]
  %s5 = inlined_call_operand.vmem [shape: f32[64,1], index: 5, kind: input, shape index: {}]
  %s6 = inlined_call_operand.<no memory space> [shape: f32[1,1], index: 6, kind: input, shape index: {}]
  %s7 = inlined_call_operand.hbm [shape: f32[1,8], index: 7, kind: output, shape index: {}]
  %s8 = sld [smem:[#allocation0]]
  $region38: #{tpu_custom_call.1} parent=0
    _
  %s10 = ssub.s32 1, %s8
  %s11 = scalar_select 0, %s10, %s8
  %v12 = vstv %s6
  %13 = vst [vmem:[#allocation2] sm:$0x1] %v12
  $region1: #{tpu_custom_call.1} parent=0
    #allocation3 [shape = 'u8[512]{0}', space=vmem, size = 0x400, scoped, tag = 'output window, operand 0, single buffered']
    #allocation4 [shape = 's32[1]{0}', space=sflag, size = 0x4, scoped, tag = 'scoped memory for tpu_custom_call.1']
    %14 = vsyncpa [#allocation4], 0
    // Predicated region
    $region2: #{tpu_custom_call.1} parent=1 // pred_check
      _
    $region3: #{tpu_custom_call.1} parent=1 // pred_check_branch
      %16 = sbr.rel (0) target = $region5
    $region4: #{tpu_custom_call.1} parent=1 // pred_region
      _
    $region5: #{tpu_custom_call.1} parent=1 // pred_fallthru
      _
    // Predicated region
    $region6: #{tpu_custom_call.1} parent=1 // pred_check
      _
    $region7: #{tpu_custom_call.1} parent=1 // pred_check_branch
      %18 = sbr.rel (0) target = $region9
    $region8: #{tpu_custom_call.1} parent=1 // pred_region
      _
    $region9: #{tpu_custom_call.1} parent=1 // pred_fallthru
      _
    // Predicated region
    $region10: #{tpu_custom_call.1} parent=1 // pred_check
      _
    $region11: #{tpu_custom_call.1} parent=1 // pred_check_branch
      %20 = sbr.rel (0) target = $region13
    $region12: #{tpu_custom_call.1} parent=1 // pred_region
      _
    $region13: #{tpu_custom_call.1} parent=1 // pred_fallthru
      _
    // Predicated region
    $region14: #{tpu_custom_call.1} parent=1 // pred_check
      _
    $region15: #{tpu_custom_call.1} parent=1 // pred_check_branch
      %22 = sbr.rel (0) target = $region17
    $region16: #{tpu_custom_call.1} parent=1 // pred_region
      _
    $region17: #{tpu_custom_call.1} parent=1 // pred_fallthru
      _
    // Predicated region
    $region18: #{tpu_custom_call.1} parent=1 // pred_check
      _
    $region19: #{tpu_custom_call.1} parent=1 // pred_check_branch
      %24 = sbr.rel (0) target = $region21
    $region20: #{tpu_custom_call.1} parent=1 // pred_region
      _
    $region21: #{tpu_custom_call.1} parent=1 // pred_fallthru
      _
    // Predicated region
    $region22: #{tpu_custom_call.1} parent=1 // pred_check
      _
    $region23: #{tpu_custom_call.1} parent=1 // pred_check_branch
      %26 = sbr.rel (0) target = $region25
    $region24: #{tpu_custom_call.1} parent=1 // pred_region
      _
    $region25: #{tpu_custom_call.1} parent=1 // pred_fallthru
      _
    // Predicated region
    $region26: #{tpu_custom_call.1} parent=1 // pred_check
      _
    $region27: #{tpu_custom_call.1} parent=1 // pred_check_branch
      %28 = sbr.rel (0) target = $region29
    $region28: #{tpu_custom_call.1} parent=1 // pred_region
      _
    $region29: #{tpu_custom_call.1} parent=1 // pred_fallthru
      _
    %v29 = vld [vmem:[%s1] sm:$0xff]
    %v30 = vld [vmem:[%s1 + $0x8] sm:$0xff]
    %v31 = vld [vmem:[%s1 + $0x10] sm:$0xff]
    %v32 = vld [vmem:[%s1 + $0x18] sm:$0xff]
    %v33 = vld [vmem:[%s0] sm:$0xff]
    %v34 = vld [vmem:[%s0 + $0x8] sm:$0xff]
    %v35 = vld [vmem:[%s0 + $0x10] sm:$0xff]
    %v36 = vld [vmem:[%s2] sm:$0xff]
    %v37 = vld [vmem:[%s2 + $0x8] sm:$0xff]
    %v38 = vld [vmem:[%s2 + $0x10] sm:$0xff]
    %v39 = vld [vmem:[%s2 + $0x18] sm:$0xff]
    %41 = vset.pattern.permute.xlu0 0
    %42 = vperm.xlu0 %41, %v36
    %v43 = vpop.permute.xlu0 %42
    %46 = vset.pattern.permute.xlu0 0
    %47 = vperm.xlu0 %46, %v37
    %v48 = vpop.permute.xlu0 %47
    %51 = vset.pattern.permute.xlu0 0
    %52 = vperm.xlu0 %51, %v38
    %v53 = vpop.permute.xlu0 %52
    %56 = vset.pattern.permute.xlu0 0
    %57 = vperm.xlu0 %56, %v39
    %v58 = vpop.permute.xlu0 %57
    %vm60 = vcmask 195584
    %v62 = vsel %vm60, %v29, 0
    %v65 = vsel %vm60, %v30, 0
    %v68 = vsel %vm60, %v31, 0
    %v71 = vsel %vm60, %v32, 0
    %73 = vmatprep.subr.mxu0 0.0
    %74 = vmatpush1.msra.mxu0 %v33
    %75 = vmatprep.subr.mxu0 0.0
    %76 = vmatpush1.msra.mxu0 %v34
    %77 = vmatprep.subr.mxu0 0.0
    %78 = vmatpush1.msra.mxu0 %v35
    %79 = vmatprep.subr.mxu0 0.0
    %80 = vmatpush1.msra.mxu0 0.0
    %81 = vmatprep.subr.mxu0 0.0
    %82 = vmatpush1.msra.mxu0 0.0
    %83 = vmatprep.subr.mxu0 0.0
    %84 = vmatpush1.msra.mxu0 0.0
    %85 = vmatprep.subr.mxu0 0.0
    %86 = vmatpush1.msra.mxu0 0.0
    %87 = vmatprep.subr.mxu0 0.0
    %88 = vmatpush1.msra.mxu0 0.0
    %89 = vmatprep.subr.mxu0 0.0
    %90 = vmatpush1.msra.mxu0 0.0
    %91 = vmatprep.subr.mxu0 0.0
    %92 = vmatpush1.msra.mxu0 0.0
    %93 = vmatprep.subr.mxu0 0.0
    %94 = vmatpush1.msra.mxu0 0.0
    %95 = vmatprep.subr.mxu0 0.0
    %96 = vmatpush1.msra.mxu0 0.0
    %97 = vmatprep.subr.mxu0 0.0
    %98 = vmatpush1.msra.mxu0 0.0
    %99 = vmatprep.subr.mxu0 0.0
    %100 = vmatpush1.msra.mxu0 0.0
    %101 = vmatprep.subr.mxu0 0.0
    %102 = vmatpush1.msra.mxu0 0.0
    %103 = vmatprep.subr.mxu0 0.0
    %104 = vmatpush1.msra.mxu0 0.0
    %105 = vmatprep.subr.mxu0 0.0
    %106 = vmatpush1.msra.mxu0 0.0
    %107 = vmatprep.subr.mxu0 0.0
    %108 = vmatpush1.msra.mxu0 0.0
    %109 = vmatprep.subr.mxu0 0.0
    %110 = vmatpush1.msra.mxu0 0.0
    %111 = vmatprep.subr.mxu0 0.0
    %112 = vmatpush1.msra.mxu0 0.0
    %113 = vmatprep.subr.mxu0 0.0
    %114 = vmatpush1.msra.mxu0 0.0
    %115 = vmatprep.subr.mxu0 0.0
    %116 = vmatpush1.msra.mxu0 0.0
    %117 = vmatprep.subr.mxu0 0.0
    %118 = vmatpush1.msra.mxu0 0.0
    %119 = vmatprep.subr.mxu0 0.0
    %120 = vmatpush1.msra.mxu0 0.0
    %121 = vmatprep.subr.mxu0 0.0
    %122 = vmatpush1.msra.mxu0 0.0
    %123 = vmatprep.subr.mxu0 0.0
    %124 = vmatpush1.msra.mxu0 0.0
    %125 = vmatprep.subr.mxu0 0.0
    %126 = vmatpush1.msra.mxu0 0.0
    %127 = vmatprep.subr.mxu0 0.0
    %128 = vmatpush1.msra.mxu0 0.0
    %129 = vmatprep.subr.mxu0 0.0
    %130 = vmatpush1.msra.mxu0 0.0
    %131 = vmatprep.subr.mxu0 0.0
    %132 = vmatpush1.msra.mxu0 0.0
    %133 = vmatprep.subr.mxu0 0.0
    %134 = vmatpush1.msra.mxu0 0.0
    %135 = vmatprep.subr.mxu0 0.0
    %136 = vmatpush1.msra.mxu0 0.0
    %137 = vmatprep.mubr.f32.mxu0 0.0
    %138 = vmatmul.mubr.f32.gmra.mrb[0].mxu0 %v62
    %v139 = vpop.f32.mrb[0].mxu0
    %v140 = vadd.f32 %v43, %v139
    %v141 = vpop.f32.mrb[0].mxu0
    %142 = vmatprep.mubr.f32.mxu0 0.0
    %143 = vmatmul.mubr.f32.gmra.mrb[0].mxu0 %v65
    %v144 = vpop.f32.mrb[0].mxu0
    %v145 = vadd.f32 %v48, %v144
    %v146 = vpop.f32.mrb[0].mxu0
    %147 = vmatprep.mubr.f32.mxu0 0.0
    %148 = vmatmul.mubr.f32.gmra.mrb[0].mxu0 %v68
    %v149 = vpop.f32.mrb[0].mxu0
    %v150 = vadd.f32 %v53, %v149
    %v151 = vpop.f32.mrb[0].mxu0
    %152 = vmatprep.mubr.f32.mxu0 0.0
    %153 = vmatmul.mubr.f32.gmra.mrb[0].mxu0 %v71
    %v154 = vpop.f32.mrb[0].mxu0
    %v155 = vadd.f32 %v58, %v154
    %v156 = vpop.f32.mrb[0].mxu0
    %157 = vdwg.mxu0
    %v158 = vmax.f32 %v140, 0.0
    %v159 = vmax.f32 %v145, 0.0
    %v160 = vmax.f32 %v150, 0.0
    %v161 = vmax.f32 %v155, 0.0
    %v162 = vld [vmem:[%s3] sm:$0xff]
    %v163 = vld [vmem:[%s3 + $0x8] sm:$0xff]
    %v164 = vld [vmem:[%s3 + $0x10] sm:$0xff]
    %v165 = vld [vmem:[%s3 + $0x18] sm:$0xff]
    %v166 = vld [vmem:[%s3 + $0x20] sm:$0xff]
    %v167 = vld [vmem:[%s3 + $0x28] sm:$0xff]
    %v168 = vld [vmem:[%s3 + $0x30] sm:$0xff]
    %v169 = vld [vmem:[%s3 + $0x38] sm:$0xff]
    %v170 = vld [vmem:[%s4] sm:$0xff]
    %v171 = vld [vmem:[%s4 + $0x8] sm:$0xff]
    %v172 = vld [vmem:[%s4 + $0x10] sm:$0xff]
    %v173 = vld [vmem:[%s4 + $0x18] sm:$0xff]
    %v174 = vld [vmem:[%s4 + $0x20] sm:$0xff]
    %v175 = vld [vmem:[%s4 + $0x28] sm:$0xff]
    %v176 = vld [vmem:[%s4 + $0x30] sm:$0xff]
    %v177 = vld [vmem:[%s4 + $0x38] sm:$0xff]
    %179 = vset.pattern.permute.xlu0 0
    %180 = vperm.xlu0 %179, %v170
    %v181 = vpop.permute.xlu0 %180
    %184 = vset.pattern.permute.xlu0 0
    %185 = vperm.xlu0 %184, %v171
    %v186 = vpop.permute.xlu0 %185
    %189 = vset.pattern.permute.xlu0 0
    %190 = vperm.xlu0 %189, %v172
    %v191 = vpop.permute.xlu0 %190
    %194 = vset.pattern.permute.xlu0 0
    %195 = vperm.xlu0 %194, %v173
    %v196 = vpop.permute.xlu0 %195
    %199 = vset.pattern.permute.xlu0 0
    %200 = vperm.xlu0 %199, %v174
    %v201 = vpop.permute.xlu0 %200
    %204 = vset.pattern.permute.xlu0 0
    %205 = vperm.xlu0 %204, %v175
    %v206 = vpop.permute.xlu0 %205
    %209 = vset.pattern.permute.xlu0 0
    %210 = vperm.xlu0 %209, %v176
    %v211 = vpop.permute.xlu0 %210
    %214 = vset.pattern.permute.xlu0 0
    %215 = vperm.xlu0 %214, %v177
    %v216 = vpop.permute.xlu0 %215
    %vm218 = vcmask 261120
    %v220 = vsel %vm218, %v162, 0
    %v223 = vsel %vm218, %v163, 0
    %v226 = vsel %vm218, %v164, 0
    %v229 = vsel %vm218, %v165, 0
    %v232 = vsel %vm218, %v166, 0
    %v235 = vsel %vm218, %v167, 0
    %v238 = vsel %vm218, %v168, 0
    %v241 = vsel %vm218, %v169, 0
    %243 = vmatprep.subr.mxu0 0.0
    %244 = vmatpush1.msra.mxu0 %v158
    %245 = vmatprep.subr.mxu0 0.0
    %246 = vmatpush1.msra.mxu0 %v159
    %247 = vmatprep.subr.mxu0 0.0
    %248 = vmatpush1.msra.mxu0 %v160
    %249 = vmatprep.subr.mxu0 0.0
    %250 = vmatpush1.msra.mxu0 %v161
    %251 = vmatprep.subr.mxu0 0.0
    %252 = vmatpush1.msra.mxu0 0.0
    %253 = vmatprep.subr.mxu0 0.0
    %254 = vmatpush1.msra.mxu0 0.0
    %255 = vmatprep.subr.mxu0 0.0
    %256 = vmatpush1.msra.mxu0 0.0
    %257 = vmatprep.subr.mxu0 0.0
    %258 = vmatpush1.msra.mxu0 0.0
    %259 = vmatprep.subr.mxu0 0.0
    %260 = vmatpush1.msra.mxu0 0.0
    %261 = vmatprep.subr.mxu0 0.0
    %262 = vmatpush1.msra.mxu0 0.0
    %263 = vmatprep.subr.mxu0 0.0
    %264 = vmatpush1.msra.mxu0 0.0
    %265 = vmatprep.subr.mxu0 0.0
    %266 = vmatpush1.msra.mxu0 0.0
    %267 = vmatprep.subr.mxu0 0.0
    %268 = vmatpush1.msra.mxu0 0.0
    %269 = vmatprep.subr.mxu0 0.0
    %270 = vmatpush1.msra.mxu0 0.0
    %271 = vmatprep.subr.mxu0 0.0
    %272 = vmatpush1.msra.mxu0 0.0
    %273 = vmatprep.subr.mxu0 0.0
    %274 = vmatpush1.msra.mxu0 0.0
    %275 = vmatprep.subr.mxu0 0.0
    %276 = vmatpush1.msra.mxu0 0.0
    %277 = vmatprep.subr.mxu0 0.0
    %278 = vmatpush1.msra.mxu0 0.0
    %279 = vmatprep.subr.mxu0 0.0
    %280 = vmatpush1.msra.mxu0 0.0
    %281 = vmatprep.subr.mxu0 0.0
    %282 = vmatpush1.msra.mxu0 0.0
    %283 = vmatprep.subr.mxu0 0.0
    %284 = vmatpush1.msra.mxu0 0.0
    %285 = vmatprep.subr.mxu0 0.0
    %286 = vmatpush1.msra.mxu0 0.0
    %287 = vmatprep.subr.mxu0 0.0
    %288 = vmatpush1.msra.mxu0 0.0
    %289 = vmatprep.subr.mxu0 0.0
    %290 = vmatpush1.msra.mxu0 0.0
    %291 = vmatprep.subr.mxu0 0.0
    %292 = vmatpush1.msra.mxu0 0.0
    %293 = vmatprep.subr.mxu0 0.0
    %294 = vmatpush1.msra.mxu0 0.0
    %295 = vmatprep.subr.mxu0 0.0
    %296 = vmatpush1.msra.mxu0 0.0
    %297 = vmatprep.subr.mxu0 0.0
    %298 = vmatpush1.msra.mxu0 0.0
    %299 = vmatprep.subr.mxu0 0.0
    %300 = vmatpush1.msra.mxu0 0.0
    %301 = vmatprep.subr.mxu0 0.0
    %302 = vmatpush1.msra.mxu0 0.0
    %303 = vmatprep.subr.mxu0 0.0
    %304 = vmatpush1.msra.mxu0 0.0
    %305 = vmatprep.subr.mxu0 0.0
    %306 = vmatpush1.msra.mxu0 0.0
    %307 = vmatprep.mubr.f32.mxu0 0.0
    %308 = vmatmul.mubr.f32.gmra.mrb[0].mxu0 %v220
    %v309 = vpop.f32.mrb[0].mxu0
    %v310 = vadd.f32 %v181, %v309
    %v311 = vpop.f32.mrb[0].mxu0
    %312 = vmatprep.mubr.f32.mxu0 0.0
    %313 = vmatmul.mubr.f32.gmra.mrb[0].mxu0 %v223
    %v314 = vpop.f32.mrb[0].mxu0
    %v315 = vadd.f32 %v186, %v314
    %v316 = vpop.f32.mrb[0].mxu0
    %317 = vmatprep.mubr.f32.mxu0 0.0
    %318 = vmatmul.mubr.f32.gmra.mrb[0].mxu0 %v226
    %v319 = vpop.f32.mrb[0].mxu0
    %v320 = vadd.f32 %v191, %v319
    %v321 = vpop.f32.mrb[0].mxu0
    %322 = vmatprep.mubr.f32.mxu0 0.0
    %323 = vmatmul.mubr.f32.gmra.mrb[0].mxu0 %v229
    %v324 = vpop.f32.mrb[0].mxu0
    %v325 = vadd.f32 %v196, %v324
    %v326 = vpop.f32.mrb[0].mxu0
    %327 = vmatprep.mubr.f32.mxu0 0.0
    %328 = vmatmul.mubr.f32.gmra.mrb[0].mxu0 %v232
    %v329 = vpop.f32.mrb[0].mxu0
    %v330 = vadd.f32 %v201, %v329
    %v331 = vpop.f32.mrb[0].mxu0
    %332 = vmatprep.mubr.f32.mxu0 0.0
    %333 = vmatmul.mubr.f32.gmra.mrb[0].mxu0 %v235
    %v334 = vpop.f32.mrb[0].mxu0
    %v335 = vadd.f32 %v206, %v334
    %v336 = vpop.f32.mrb[0].mxu0
    %337 = vmatprep.mubr.f32.mxu0 0.0
    %338 = vmatmul.mubr.f32.gmra.mrb[0].mxu0 %v238
    %v339 = vpop.f32.mrb[0].mxu0
    %v340 = vadd.f32 %v211, %v339
    %v341 = vpop.f32.mrb[0].mxu0
    %342 = vmatprep.mubr.f32.mxu0 0.0
    %343 = vmatmul.mubr.f32.gmra.mrb[0].mxu0 %v241
    %v344 = vpop.f32.mrb[0].mxu0
    %v345 = vadd.f32 %v216, %v344
    %v346 = vpop.f32.mrb[0].mxu0
    %347 = vdwg.mxu0
    %v348 = vmax.f32 %v310, 0.0
    %v349 = vmax.f32 %v315, 0.0
    %v350 = vmax.f32 %v320, 0.0
    %v351 = vmax.f32 %v325, 0.0
    %v352 = vmax.f32 %v330, 0.0
    %v353 = vmax.f32 %v335, 0.0
    %v354 = vmax.f32 %v340, 0.0
    %v355 = vmax.f32 %v345, 0.0
    %v356 = vld [vmem:[%s5] sm:$0xff]
    %v357 = vld [vmem:[%s5 + $0x8] sm:$0xff]
    %v358 = vld [vmem:[%s5 + $0x10] sm:$0xff]
    %v359 = vld [vmem:[%s5 + $0x18] sm:$0xff]
    %v360 = vld [vmem:[%s5 + $0x20] sm:$0xff]
    %v361 = vld [vmem:[%s5 + $0x28] sm:$0xff]
    %v362 = vld [vmem:[%s5 + $0x30] sm:$0xff]
    %v363 = vld [vmem:[%s5 + $0x38] sm:$0xff]
    %365 = vset.pattern.permute.xlu0 0
    %366 = vperm.xlu0 %365, %v356
    %v367 = vpop.permute.xlu0 %366
    %370 = vset.pattern.permute.xlu0 0
    %371 = vperm.xlu0 %370, %v357
    %v372 = vpop.permute.xlu0 %371
    %375 = vset.pattern.permute.xlu0 0
    %376 = vperm.xlu0 %375, %v358
    %v377 = vpop.permute.xlu0 %376
    %380 = vset.pattern.permute.xlu0 0
    %381 = vperm.xlu0 %380, %v359
    %v382 = vpop.permute.xlu0 %381
    %385 = vset.pattern.permute.xlu0 0
    %386 = vperm.xlu0 %385, %v360
    %v387 = vpop.permute.xlu0 %386
    %390 = vset.pattern.permute.xlu0 0
    %391 = vperm.xlu0 %390, %v361
    %v392 = vpop.permute.xlu0 %391
    %395 = vset.pattern.permute.xlu0 0
    %396 = vperm.xlu0 %395, %v362
    %v397 = vpop.permute.xlu0 %396
    %400 = vset.pattern.permute.xlu0 0
    %401 = vperm.xlu0 %400, %v363
    %v402 = vpop.permute.xlu0 %401
    %v404 = vmul.f32 %v348, %v367
    %v405 = vmul.f32 %v349, %v372
    %v406 = vmul.f32 %v350, %v377
    %v407 = vmul.f32 %v351, %v382
    %v408 = vmul.f32 %v352, %v387
    %v409 = vmul.f32 %v353, %v392
    %v410 = vmul.f32 %v354, %v397
    %v411 = vmul.f32 %v355, %v402
    %vm412 = vcmask 64512
    %v413 = vsel %vm412, %v404, 0.0
    %v414 = vsel %vm412, %v405, 0.0
    %v415 = vadd.f32 %v413, %v414
    %v416 = vsel %vm412, %v406, 0.0
    %v417 = vadd.f32 %v415, %v416
    %v418 = vsel %vm412, %v407, 0.0
    %v419 = vadd.f32 %v417, %v418
    %v420 = vsel %vm412, %v408, 0.0
    %v421 = vadd.f32 %v419, %v420
    %v422 = vsel %vm412, %v409, 0.0
    %v423 = vadd.f32 %v421, %v422
    %v424 = vsel %vm412, %v410, 0.0
    %v425 = vadd.f32 %v423, %v424
    %v426 = vsel %vm412, %v411, 0.0
    %v427 = vadd.f32 %v425, %v426
    %v428 = vrot.slane %v427, 4
    %v429 = vadd.f32 %v427, %v428
    %v430 = vrot.slane %v429, 2
    %v431 = vadd.f32 %v429, %v430
    %v432 = vrot.slane %v431, 1
    %v433 = vadd.f32 %v431, %v432
    %v434 = vld [vmem:[#allocation2] sm:$0x1]
    %436 = vset.pattern.permute.xlu0 0
    %437 = vperm.xlu0 %436, %v434
    %v438 = vpop.permute.xlu0 %437
    %v440 = vlaneseq
    %v441 = vshrl.u32 %v440, 7
    %v442 = vsub.s32 0, %v441
    %v443 = vrot.slane %v438, %v442
    %v444 = vadd.f32 %v433, %v443
    %vm445 = vcmask 57344
    %446 = vst.msk [vmem:[#allocation3] sm:$0x1] %vm445, %v444
    // Predicated region
    $region30: #{tpu_custom_call.1} parent=1 // pred_check
      _
    $region31: #{tpu_custom_call.1} parent=1 // pred_check_branch
      %448 = sbr.rel (0) target = $region33
    $region32: #{tpu_custom_call.1} parent=1 // pred_region
      %s450 = ssub.s32 16, 16
      %451 = vsyncadd [#allocation4], %s450
      %s453 = sshll.u32 [#allocation3], 4
      %s454 = int_to_ptr.vmem [resolvable:$true] %s453
      %456 = dma.vmem_to_hbm [thread:$0]  %s454, 16, %s7, [#allocation4]
    $region33: #{tpu_custom_call.1} parent=1 // pred_fallthru
      _
    // Predicated region
    $region34: #{tpu_custom_call.1} parent=1 // pred_check
      _
    $region35: #{tpu_custom_call.1} parent=1 // pred_check_branch
      %458 = sbr.rel (0) target = $region37
    $region36: #{tpu_custom_call.1} parent=1 // pred_region
      %459 = dma.done [#allocation4], 16
    $region37: #{tpu_custom_call.1} parent=1 // pred_fallthru
      _
    %460 = vsyncpa [#allocation4], 1

</llo_original>
